<compile_context>
chip_gen: v5e
topology: v5e:2x2
jax: 0.10.0
libtpu: 0.0.40
codegen_flags: <defaults>
</compile_context>

<pallas_src>
import numpy as np
import jax
import jax.numpy as jnp
from jax import lax
from jax.experimental import pallas as pl
from jax.experimental.pallas import tpu as pltpu


# --------------------------------------------------------------------------- #
# Kernel
# --------------------------------------------------------------------------- #
def _make_kernel(C, ip, R, bblk, HW, HWp, static_unroll):
    """C = inplanes(=planes), ip = inter_planes, R = C + 1 + 2*ip (fused weight rows),
    bblk = batch elements per grid step, HW = true pixels, HWp = lane-padded pixels."""
    inv_hw = np.float32(1.0 / HW)              # true-HW mean (zero padding contributes 0)
    needs_mask = HWp != HW

    def apply_one(xb, pj, valid):
        # xb: (C, HWp) f32 input slab for one batch element (channels on sublanes).
        # pj: (R, HWp) f32 fused projection [ (Wup@Wvr)@x ; Wqr@x ; Wql@x ; Wvl@x ].
        pf    = pj[0:C, :]                     # channel branch (conv_up pre-folded)
        q     = pj[C:C + 1, :]                 # conv_q_right(x)
        g_x   = pj[C + 1:C + 1 + ip, :]        # conv_q_left(x)
        theta = pj[C + 1 + ip:R, :]            # conv_v_left(x)

        if needs_mask:
            q = jnp.where(valid, q, -jnp.inf)

        # ---- spatial_attention -> per-channel mask (C, 1) ----
        e = jnp.exp(q - jnp.max(q, axis=1, keepdims=True))            # (1, HWp)
        denom = jnp.sum(e, axis=1, keepdims=True)                     # (1, 1)
        # pf @ softmax(q)^T on the MXU (contract over HW); exact divide (tiny denom).
        up = lax.dot_general(pf, e, (((1,), (1,)), ((), ())),
                             preferred_element_type=jnp.float32) / denom   # (C, 1)
        mask_ch = jax.nn.sigmoid(up)                                   # (C, 1)

        # ---- spectral_attention -> per-pixel mask (1, HWp) ----
        avg = jnp.sum(g_x, axis=1, keepdims=True) * inv_hw             # (ip, 1) avg-pool
        ctx = jnp.sum(avg * theta, axis=0, keepdims=True)              # (1, HWp)
        if needs_mask:
            ctx = jnp.where(valid, ctx, -jnp.inf)
        e2 = jnp.exp(ctx - jnp.max(ctx, axis=1, keepdims=True))        # (1, HWp)
        sm = e2 / jnp.sum(e2, axis=1, keepdims=True)                   # exact softmax
        mask_sp = jax.nn.sigmoid(sm)                                   # (1, HWp)

        # mode == 'ch*sp':  out = x * mask_ch * mask_sp
        return xb * mask_ch * mask_sp

    def kernel(x_ref, wall_ref, o_ref, proj_ref):
        wall = wall_ref[...]                                           # (R, C) f32
        # ONE channel-contracting MXU matmul for the whole batch block.
        proj_ref[...] = jnp.dot(wall, x_ref[...].astype(jnp.float32),
                                preferred_element_type=jnp.float32)    # (R, bblk*HWp)

        valid = (lax.broadcasted_iota(jnp.int32, (1, HWp), 1) < HW) if needs_mask else None

        def one_batch(b, lo):
            xb = x_ref[:, pl.ds(lo, HWp)].astype(jnp.float32)          # (C, HWp)
            pj = proj_ref[:, pl.ds(lo, HWp)]                           # (R, HWp)
            o_ref[b] = apply_one(xb, pj, valid).astype(o_ref.dtype)

        if static_unroll:
            # Small live footprint: full static unroll (best LLO scheduler visibility).
            for b in range(bblk):
                one_batch(b, b * HWp)
        else:
            # Bounded code size / live ranges for large bblk*HW.
            def body(b, carry):
                one_batch(b, pl.multiple_of(b * HWp, 128))
                return carry
            lax.fori_loop(0, bblk, body, 0, unroll=2)

    return kernel


# --------------------------------------------------------------------------- #
# Host wrapper
# --------------------------------------------------------------------------- #
def _vmem_capacity_bytes():
    """Physical VMEM per TensorCore (128 MiB v5e/v6e, 64 MiB v7x); conservative fallback."""
    try:
        cap = getattr(pltpu.get_tpu_info(), "vmem_capacity_bytes", None)
        if cap:
            return int(cap)
    except Exception:
        pass
    return 64 * 1024 * 1024


def _pick_block_batch(B, C, R, HWp, io_itemsize, budget_bytes, min_grid=8):
    """Largest divisor of B whose pipelined block footprint (double-buffered in+out
    plus the f32 proj scratch) stays inside `budget_bytes`, while leaving >= min_grid
    grid steps when B allows (steady-state pipeline; feeds both v7x TensorCores)."""
    per_batch = 4 * C * HWp * io_itemsize + R * HWp * 4
    bblk = max(1, budget_bytes // per_batch)
    bblk = min(bblk, max(1, B // min_grid))
    bblk = int(max(1, min(bblk, B)))
    while B % bblk:
        bblk -= 1
    return bblk


def sdl_attention(x, wqr, wvr, wup, wql, wvl, io_dtype=None):
    """SDL_attention.forward (mode='ch*sp') for x: (B, C, H, W).

    Weights are the 1x1-conv kernels squeezed to 2D:
      wqr:(1,C)  wvr:(ip,C)  wup:(planes,ip)  wql:(ip,C)  wvl:(ip,C)
    Requires planes == C (needed for the x * mask_ch broadcast, as in torch).
    io_dtype: optional narrower dtype (e.g. jnp.bfloat16) for kernel I/O — halves HBM
    traffic on this mem-bound kernel; internal math stays f32 (numerics change only
    at the I/O cast)."""
    B, C, H, W = x.shape
    HW = H * W
    ip = wvr.shape[0]
    planes = wup.shape[0]
    assert planes == C, "broadcast x * mask_ch requires planes == inplanes"

    io_dtype = jnp.dtype(x.dtype if io_dtype is None else io_dtype)
    io_itemsize = io_dtype.itemsize
    HWp = ((HW + 127) // 128) * 128            # lane-dense stores (multiple of 128)

    # Channels-major layout: the whole batch block rides ONE channel-contracting matmul.
    xcm = jnp.transpose(x.reshape(B, C, HW), (1, 0, 2))                  # (C, B, HW)
    if HWp != HW:
        xcm = jnp.pad(xcm, ((0, 0), (0, 0), (0, HWp - HW)))
    xcm = xcm.reshape(C, B * HWp).astype(io_dtype)

    # Fold conv_up into conv_v_right:  Wup @ ((Wvr@x) @ sm^T) == ((Wup@Wvr) @ x) @ sm^T
    wfold = jnp.dot(wup.astype(jnp.float32), wvr.astype(jnp.float32))    # (C, C)
    wall = jnp.concatenate(
        [wfold, wqr.astype(jnp.float32), wql.astype(jnp.float32),
         wvl.astype(jnp.float32)], axis=0)                               # (R, C)
    R = wall.shape[0]

    # Generation-aware VMEM budgeting (v5e/v6e: 128 MiB physical, v7x: 64 MiB per TC).
    vmem_cap = _vmem_capacity_bytes()
    vmem_limit = min(64 << 20, vmem_cap // 2)
    bblk = _pick_block_batch(B, C, R, HWp, io_itemsize, int(vmem_limit * 0.8))
    grid = (B // bblk,)

    footprint = bblk * (4 * C * HWp * io_itemsize + R * HWp * 4) + R * C * 4 + (2 << 20)
    if footprint > vmem_limit:
        # A single batch element already exceeds the budget: keep bblk (==1) and raise
        # the limit, staying below physical VMEM.
        # TODO(synk): for C*HW slabs that do not fit VMEM even at bblk=1, split HW
        # across the grid with a two-pass (reduce, then apply) online structure.
        vmem_limit = int(min(max(vmem_cap - (8 << 20), vmem_limit), footprint + (4 << 20)))

    # Static unroll only while the unrolled live intermediates stay well under the
    # 64 x 4 KiB vreg file; otherwise fori_loop bounds live ranges (no spills).
    static_unroll = (bblk <= 8) and (bblk * (2 * C + 8) * HWp * 4 <= 128 * 1024)

    cost = pl.CostEstimate(
        flops=2 * B * HW * C * (R + 1),                 # projection + pf@softmax^T
        transcendentals=B * (3 * HW + C),               # two exps + sigmoids
        bytes_accessed=2 * B * C * HWp * io_itemsize + R * C * 4,
    )

    out = pl.pallas_call(
        _make_kernel(C, ip, R, bblk, HW, HWp, static_unroll),
        out_shape=jax.ShapeDtypeStruct((B, C, HWp), io_dtype),
        grid_spec=pltpu.PrefetchScalarGridSpec(
            num_scalar_prefetch=0,
            grid=grid,
            in_specs=[
                pl.BlockSpec((C, bblk * HWp), lambda g: (0, g)),   # x, channels-major
                pl.BlockSpec((R, C), lambda g: (0, 0)),            # fused conv weights
            ],
            out_specs=pl.BlockSpec((bblk, C, HWp), lambda g: (g, 0, 0)),
            scratch_shapes=[pltpu.VMEM((R, bblk * HWp), jnp.float32)],  # fused projection
        ),
        compiler_params=pltpu.CompilerParams(
            # TODO(synk): on v7x consider pltpu.CORE_PARALLEL here if ("parallel",)
            # does not shard the batch grid axis across the two TensorCores.
            dimension_semantics=(pltpu.PARALLEL,),
            vmem_limit_bytes=int(vmem_limit),
        ),
        cost_estimate=cost,
    )(xcm, wall)

    if HWp != HW:
        out = out[..., :HW]
    return out.reshape(B, C, H, W)


# --------------------------------------------------------------------------- #
# Pure-JAX reference (replica of SDL_attention.forward, mode='ch*sp')
# --------------------------------------------------------------------------- #
def reference(x, wqr, wvr, wup, wql, wvl):
    B, C, H, W = x.shape
    HW = H * W
    xf = x.reshape(B, C, HW)
    v_right = jnp.einsum('oc,bch->boh', wvr, xf)            # (B, ip, HW)
    q = jnp.einsum('oc,bch->boh', wqr, xf)                  # (B, 1, HW)
    sm = jax.nn.softmax(q, axis=2)
    context = jnp.einsum('bih,bjh->bij', v_right, sm)       # (B, ip, 1)
    up = jnp.einsum('pi,bij->bpj', wup, context)            # (B, planes, 1)
    mask_ch = jax.nn.sigmoid(up)[..., None]                 # (B, planes, 1, 1)
    g_x = jnp.einsum('oc,bch->boh', wql, xf)                # (B, ip, HW)
    avg = jnp.mean(g_x, axis=2, keepdims=True)              # (B, ip, 1)
    theta = jnp.einsum('oc,bch->boh', wvl, xf)              # (B, ip, HW)
    ctx = jnp.sum(avg * theta, axis=1, keepdims=True)       # (B, 1, HW)
    sm_sp = jax.nn.softmax(ctx, axis=2)
    mask_sp = jax.nn.sigmoid(sm_sp).reshape(B, 1, H, W)
    return x * mask_ch * mask_sp


if __name__ == "__main__":
    # Module config: inplanes = planes = 4 (so the x * mask_ch broadcast works, as in
    # torch), inter_planes = planes // 2 = 2.
    inplanes = 4
    planes = 4
    ip = planes // 2
    B, H, W = 2, 16, 16

    key = jax.random.PRNGKey(0)
    k1, k2, k3, k4, k5, kx = jax.random.split(key, 6)

    def kaiming_normal(k, out_c, in_c):
        # fan_in mode, relu gain: std = sqrt(2 / fan_in), fan_in = in_c * 1 * 1
        return jax.random.normal(k, (out_c, in_c), jnp.float32) * np.sqrt(2.0 / in_c)

    wqr = kaiming_normal(k1, 1, inplanes)          # conv_q_right
    wvr = kaiming_normal(k2, ip, inplanes)         # conv_v_right
    wql = kaiming_normal(k3, ip, inplanes)         # conv_q_left
    wvl = kaiming_normal(k4, ip, inplanes)         # conv_v_left
    # conv_up keeps PyTorch's default Conv2d init; any deterministic init works here.
    wup = jax.random.normal(k5, (planes, ip), jnp.float32) * (1.0 / np.sqrt(ip))

    x = jax.random.normal(kx, (B, inplanes, H, W), jnp.float32)

    out = sdl_attention(x, wqr, wvr, wup, wql, wvl)
    out = jax.block_until_ready(out)

    ref = reference(x, wqr, wvr, wup, wql, wvl)
    # Exact divides inside the kernel; only the Wup@Wvr weight fold and summation
    # order differ from the reference, so the tolerance can be tight.
    np.testing.assert_allclose(np.asarray(out), np.asarray(ref), rtol=5e-4, atol=1e-5)
    print("KERNEL_OK")
</pallas_src>

<mosaic_0001>
module attributes {stable_mosaic.version = 11 : i64} {
  func.func @kernel(%arg0: i32, %arg1: memref<4x256xf32, #tpu.memory_space<vmem>>, %arg2: memref<9x4xf32, #tpu.memory_space<vmem>>, %arg3: memref<1x4x256xf32, #tpu.memory_space<vmem>>, %arg4: memref<9x256xf32, #tpu.memory_space<vmem>>) attributes {dimension_semantics = [#tpu.dimension_semantics<parallel>], iteration_bounds = array<i64: 2>, scalar_prefetch = 0 : i64, scratch_operands = 1 : i64, tpu.core_type = #tpu.core_type<tc>, window_params = [{transform_indices = @transform_0, window_bounds = array<i64: 4, 256>}, {pipeline_mode = #tpu.pipeline_mode<synchronous>, transform_indices = @transform_1, window_bounds = array<i64: 9, 4>}, {transform_indices = @transform_2, window_bounds = array<i64: 1, 4, 256>}]} {
    %c0 = arith.constant 0 : index
    %c0_0 = arith.constant 0 : index
    %0 = vector.load %arg2[%c0, %c0_0] : memref<9x4xf32, #tpu.memory_space<vmem>>, vector<9x4xf32>
    %c0_1 = arith.constant 0 : index
    %c0_2 = arith.constant 0 : index
    %1 = vector.load %arg1[%c0_1, %c0_2] : memref<4x256xf32, #tpu.memory_space<vmem>>, vector<4x256xf32>
    %cst = arith.constant dense<0.000000e+00> : vector<9x256xf32>
    %2 = tpu.matmul %0, %1, %cst {dimension_numbers = #tpu.dot_dimension_numbers<[1], [0], [0], [1], [0, 0, 1, 1], [], []>} : vector<9x4xf32>, vector<4x256xf32>, vector<9x256xf32> -> vector<9x256xf32>
    %c0_3 = arith.constant 0 : index
    %c0_4 = arith.constant 0 : index
    %3 = vector.load %arg4[%c0_3, %c0_4] : memref<9x256xf32, #tpu.memory_space<vmem>>, vector<9x256xf32>
    tpu.vector_store %arg4[%c0_3, %c0_4], %2 {strides = array<i32>} : memref<9x256xf32, #tpu.memory_space<vmem>>, vector<9x256xf32>,
    %c0_5 = arith.constant 0 : index
    %c0_6 = arith.constant 0 : index
    %4 = vector.load %arg1[%c0_5, %c0_6] : memref<4x256xf32, #tpu.memory_space<vmem>>, vector<4x256xf32>
    %c0_7 = arith.constant 0 : index
    %c0_8 = arith.constant 0 : index
    %5 = vector.load %arg4[%c0_7, %c0_8] : memref<9x256xf32, #tpu.memory_space<vmem>>, vector<9x256xf32>
    %6 = vector.extract_strided_slice %5 {offsets = [0, 0], sizes = [4, 256], strides = [1, 1]} : vector<9x256xf32> to vector<4x256xf32>
    %7 = vector.extract_strided_slice %5 {offsets = [4, 0], sizes = [1, 256], strides = [1, 1]} : vector<9x256xf32> to vector<1x256xf32>
    %8 = vector.extract_strided_slice %5 {offsets = [5, 0], sizes = [2, 256], strides = [1, 1]} : vector<9x256xf32> to vector<2x256xf32>
    %9 = vector.extract_strided_slice %5 {offsets = [7, 0], sizes = [2, 256], strides = [1, 1]} : vector<9x256xf32> to vector<2x256xf32>
    %cst_9 = arith.constant dense<0xFF800000> : vector<1xf32>
    %10 = vector.multi_reduction <maximumf>, %7, %cst_9 [1] : vector<1x256xf32> to vector<1xf32>
    %11 = vector.shape_cast %10 : vector<1xf32> to vector<1x1xf32>
    %12 = vector.broadcast %11 : vector<1x1xf32> to vector<1x256xf32>
    %13 = arith.subf %7, %12 : vector<1x256xf32>
    %14 = math.exp %13 : vector<1x256xf32>
    %cst_10 = arith.constant dense<0.000000e+00> : vector<1xf32>
    %15 = vector.multi_reduction <add>, %14, %cst_10 [1] : vector<1x256xf32> to vector<1xf32>
    %16 = vector.shape_cast %15 : vector<1xf32> to vector<1x1xf32>
    %cst_11 = arith.constant dense<0.000000e+00> : vector<4x1xf32>
    %17 = tpu.matmul %6, %14, %cst_11 {dimension_numbers = #tpu.dot_dimension_numbers<[1], [1], [0], [0], [0, 0, 1, 0], [], []>} : vector<4x256xf32>, vector<1x256xf32>, vector<4x1xf32> -> vector<4x1xf32>
    %18 = vector.broadcast %16 : vector<1x1xf32> to vector<4x1xf32>
    %19 = arith.divf %17, %18 : vector<4x1xf32>
    %20 = arith.negf %19 : vector<4x1xf32>
    %21 = math.exp %20 : vector<4x1xf32>
    %cst_12 = arith.constant 1.000000e+00 : f32
    %22 = vector.broadcast %cst_12 : f32 to vector<4x1xf32>
    %23 = arith.addf %22, %21 : vector<4x1xf32>
    %24 = arith.divf %22, %23 : vector<4x1xf32>
    %cst_13 = arith.constant dense<0.000000e+00> : vector<2xf32>
    %25 = vector.multi_reduction <add>, %8, %cst_13 [1] : vector<2x256xf32> to vector<2xf32>
    %26 = vector.shape_cast %25 : vector<2xf32> to vector<2x1xf32>
    %cst_14 = arith.constant 3.906250e-03 : f32
    %27 = vector.broadcast %cst_14 : f32 to vector<2x1xf32>
    %28 = arith.mulf %26, %27 : vector<2x1xf32>
    %29 = vector.broadcast %28 : vector<2x1xf32> to vector<2x256xf32>
    %30 = arith.mulf %29, %9 : vector<2x256xf32>
    %cst_15 = arith.constant dense<0.000000e+00> : vector<256xf32>
    %31 = vector.multi_reduction <add>, %30, %cst_15 [0] : vector<2x256xf32> to vector<256xf32>
    %32 = vector.shape_cast %31 : vector<256xf32> to vector<1x256xf32>
    %cst_16 = arith.constant dense<0xFF800000> : vector<1xf32>
    %33 = vector.multi_reduction <maximumf>, %32, %cst_16 [1] : vector<1x256xf32> to vector<1xf32>
    %34 = vector.shape_cast %33 : vector<1xf32> to vector<1x1xf32>
    %35 = vector.broadcast %34 : vector<1x1xf32> to vector<1x256xf32>
    %36 = arith.subf %32, %35 : vector<1x256xf32>
    %37 = math.exp %36 : vector<1x256xf32>
    %cst_17 = arith.constant dense<0.000000e+00> : vector<1xf32>
    %38 = vector.multi_reduction <add>, %37, %cst_17 [1] : vector<1x256xf32> to vector<1xf32>
    %39 = vector.shape_cast %38 : vector<1xf32> to vector<1x1xf32>
    %40 = vector.broadcast %39 : vector<1x1xf32> to vector<1x256xf32>
    %41 = arith.divf %37, %40 : vector<1x256xf32>
    %42 = arith.negf %41 : vector<1x256xf32>
    %43 = math.exp %42 : vector<1x256xf32>
    %cst_18 = arith.constant 1.000000e+00 : f32
    %44 = vector.broadcast %cst_18 : f32 to vector<1x256xf32>
    %45 = arith.addf %44, %43 : vector<1x256xf32>
    %46 = arith.divf %44, %45 : vector<1x256xf32>
    %47 = vector.broadcast %24 : vector<4x1xf32> to vector<4x256xf32>
    %48 = arith.mulf %4, %47 : vector<4x256xf32>
    %49 = vector.broadcast %46 : vector<1x256xf32> to vector<4x256xf32>
    %50 = arith.mulf %48, %49 : vector<4x256xf32>
    %c0_19 = arith.constant 0 : index
    %c0_20 = arith.constant 0 : index
    %c0_21 = arith.constant 0 : index
    %51 = vector.load %arg3[%c0_19, %c0_20, %c0_21] : memref<1x4x256xf32, #tpu.memory_space<vmem>>, vector<1x4x256xf32>
    %52 = vector.shape_cast %51 : vector<1x4x256xf32> to vector<4x256xf32>
    %53 = vector.shape_cast %50 : vector<4x256xf32> to vector<1x4x256xf32>
    tpu.vector_store %arg3[%c0_19, %c0_20, %c0_21], %53 {strides = array<i32>} : memref<1x4x256xf32, #tpu.memory_space<vmem>>, vector<1x4x256xf32>,
    return
  }
  func.func @transform_0(%arg0: i32) -> (i32, i32) {
    %c0_i32 = arith.constant 0 : i32
    %c0_i32_0 = arith.constant 0 : i32
    return %c0_i32, %arg0 : i32, i32
  }
  func.func @transform_1(%arg0: i32) -> (i32, i32) {
    %c0_i32 = arith.constant 0 : i32
    %c0_i32_0 = arith.constant 0 : i32
    %c0_i32_1 = arith.constant 0 : i32
    return %c0_i32, %c0_i32_0 : i32, i32
  }
  func.func @transform_2(%arg0: i32) -> (i32, i32, i32) {
    %c0_i32 = arith.constant 0 : i32
    %c0_i32_0 = arith.constant 0 : i32
    %c0_i32_1 = arith.constant 0 : i32
    return %arg0, %c0_i32, %c0_i32_0 : i32, i32, i32
  }
}

</mosaic_0001>

<llo_original>
// kernel: tpu_custom_call.1
$region0: #{tpu_custom_call.1}
  #allocation0 [shape = 'u32[]', space=smem, size = 0x4, offset = 0x4, fixed_abs, tag = 'smem constant byte address 0x4 - core index']
  #allocation1 [shape = 'u32[72,128]{1,0:T(1,128)}', space=vmem, size = 0x9000, scoped, tag = 'internal scratch']
  #allocation2 [shape = 'f32[9,256]{1,0:T(8,128)}', space=vmem, size = 0x4000, scoped, tag = 'scratch operand']
  %s0 = inlined_call_operand.vmem [shape: f32[4,512], index: 0, kind: input, shape index: {}]
  %s1 = inlined_call_operand.vmem [shape: f32[9,4], index: 1, kind: input, shape index: {}]
  %s2 = inlined_call_operand.hbm [shape: f32[2,4,256], index: 2, kind: output, shape index: {}]
  %s3 = sld [smem:[#allocation0]]
  $region41: #{tpu_custom_call.1} parent=0
    _
  %s5 = ssub.s32 1, %s3
  %s6 = scalar_select 0, %s5, %s3
  $region1: #{tpu_custom_call.1} parent=0
    #allocation3 [shape = 'u8[8192]{0}', space=vmem, size = 0x2000, scoped, tag = 'output window, operand 0']
    #allocation4 [shape = 's32[2]{0}', space=sflag, size = 0x8, scoped, tag = 'scoped memory for tpu_custom_call.1']
    %7 = vsyncpa [#allocation4], 0
    %s8 = scalar_lea.sflag [#allocation4], 1
    %9 = vsyncpa %s8, 0
    loop: start=0, step=1, limit=4
    $region2: #{tpu_custom_call.1} parent=1 // loop_pre_header
      _
    $region3: #{tpu_custom_call.1} parent=1 // loop_header
      %s11 = sphi 0, %s15
      %p12 = scmp.ge.s32.totalorder %s11, 4
      %s21 = sphi 0, %s23
      %s24 = sphi 0, %s21
      %s25 = sphi 0, %s24
      %s41 = sphi 0, %s25
      %s45 = sphi 0, %s45
      %s47 = sphi 0, %s45
      %s48 = sphi 0, %s47
      %s62 = sphi 0, %s48
      %s68 = sphi 0, %s70
      %s71 = sphi 0, %s68
      %s72 = sphi 0, %s71
      %s88 = sphi 0, %s72
    $region4: #{tpu_custom_call.1} parent=1 // loop_header_branch
      %14 = sbr.rel (%p12) target = $region8
    $region5: #{tpu_custom_call.1} parent=1 // loop_body
      %s16 = ssub.s32 %s11, 1
      %s17 = ssub.s32 %s11, 2
      %s18 = sadd.s32 %s11, 1
      %s19 = ssub.s32 %s11, %s18
      %p20 = scmp.eq.s32.totalorder %s19, 0
      %s22 = sadd.s32 %s21, 1
      %s23 = scalar_select %p20, %s21, %s22
      %p26 = pneg %p20
      %p27 = scmp.eq.s32.totalorder %s11, 1
      %p28 = por %p26, %p27
      %p29 = scmp.ne.s32.totalorder %s21, %s24
      %p30 = scmp.eq.s32.totalorder %s11, 0
      %p31 = por %p29, %p30
      %p32 = scmp.ne.s32.totalorder %s21, %s24
      %p33 = scmp.eq.s32.totalorder %s16, 1
      %p34 = por %p32, %p33
      %p35 = scmp.ne.s32.totalorder %s24, %s25
      %p36 = scmp.eq.s32.totalorder %s16, 0
      %p37 = por %p35, %p36
      %p38 = scmp.ne.s32.totalorder %s24, %s25
      %p39 = scmp.eq.s32.totalorder %s17, 1
      %p40 = por %p38, %p39
      %p42 = scmp.ne.s32.totalorder %s25, %s41
      %p43 = scmp.eq.s32.totalorder %s17, 0
      %p44 = por %p42, %p43
      %s46 = sadd.s32 %s45, 1
      %p49 = scmp.eq.s32.totalorder %s11, 1
      %p50 = scmp.ne.s32.totalorder %s45, %s47
      %p51 = scmp.eq.s32.totalorder %s11, 0
      %p52 = por %p50, %p51
      %p53 = scmp.ne.s32.totalorder %s45, %s47
      %p54 = scmp.eq.s32.totalorder %s16, 1
      %p55 = por %p53, %p54
      %p56 = scmp.ne.s32.totalorder %s47, %s48
      %p57 = scmp.eq.s32.totalorder %s16, 0
      %p58 = por %p56, %p57
      %p59 = scmp.ne.s32.totalorder %s47, %s48
      %p60 = scmp.eq.s32.totalorder %s17, 1
      %p61 = por %p59, %p60
      %p63 = scmp.ne.s32.totalorder %s48, %s62
      %p64 = scmp.eq.s32.totalorder %s17, 0
      %p65 = por %p63, %p64
      %s66 = ssub.s32 %s11, %s18
      %p67 = scmp.eq.s32.totalorder %s66, 0
      %s69 = sadd.s32 %s68, 1
      %s70 = scalar_select %p67, %s68, %s69
      %p73 = pneg %p67
      %p74 = scmp.eq.s32.totalorder %s11, 1
      %p75 = por %p73, %p74
      %p76 = scmp.ne.s32.totalorder %s68, %s71
      %p77 = scmp.eq.s32.totalorder %s11, 0
      %p78 = por %p76, %p77
      %p79 = scmp.ne.s32.totalorder %s68, %s71
      %p80 = scmp.eq.s32.totalorder %s16, 1
      %p81 = por %p79, %p80
      %p82 = scmp.ne.s32.totalorder %s71, %s72
      %p83 = scmp.eq.s32.totalorder %s16, 0
      %p84 = por %p82, %p83
      %p85 = scmp.ne.s32.totalorder %s71, %s72
      %p86 = scmp.eq.s32.totalorder %s17, 1
      %p87 = por %p85, %p86
      %p89 = scmp.ne.s32.totalorder %s72, %s88
      %p90 = scmp.eq.s32.totalorder %s17, 0
      %p91 = por %p89, %p90
      %p92 = scmp.le.s32.totalorder 1, %s11
      %p93 = scmp.lt.s32.totalorder %s11, 3
      %p94 = pnand %p92, %p93
      %p95 = pneg %p94
      // Predicated region
      $region9: #{tpu_custom_call.1} parent=5 // pred_check
        _
      $region10: #{tpu_custom_call.1} parent=5 // pred_check_branch
        %97 = sbr.rel (%p94) target = $region12
      $region11: #{tpu_custom_call.1} parent=5 // pred_region
        %s98 = ssub.s32 %s11, 1
        // Predicated region
        $region13: #{tpu_custom_call.1} parent=11 // pred_check
          %p99 = pneg %p58
        $region14: #{tpu_custom_call.1} parent=11 // pred_check_branch
          %101 = sbr.rel (%p99) target = $region16
        $region15: #{tpu_custom_call.1} parent=11 // pred_region
          _
        $region16: #{tpu_custom_call.1} parent=11 // pred_fallthru
          _
      $region12: #{tpu_custom_call.1} parent=5 // pred_fallthru
        _
      %p102 = scmp.lt.s32.totalorder %s11, 2
      // Predicated region
      $region17: #{tpu_custom_call.1} parent=5 // pred_check
        %p103 = pneg %p102
      $region18: #{tpu_custom_call.1} parent=5 // pred_check_branch
        %105 = sbr.rel (%p103) target = $region20
      $region19: #{tpu_custom_call.1} parent=5 // pred_region
        // Predicated region
        $region21: #{tpu_custom_call.1} parent=19 // pred_check
          %p106 = pneg %p31
        $region22: #{tpu_custom_call.1} parent=19 // pred_check_branch
          %108 = sbr.rel (%p106) target = $region24
        $region23: #{tpu_custom_call.1} parent=19 // pred_region
          %s109 = smul.u32 2, %s11
          %p110 = scmp.lt.s32.totalorder %s109, 3
          %s111 = scalar_select %p110, %s109, 3
          %s112 = smul.addr %s111, 4
          %s113 = scalar_lea.vmem %s0, %s112
          %s114 = smul.u32 2, %s11
        $region24: #{tpu_custom_call.1} parent=19 // pred_fallthru
          _
      $region20: #{tpu_custom_call.1} parent=5 // pred_fallthru
        _
      %p115 = scmp.le.s32.totalorder 1, %s11
      %p116 = scmp.lt.s32.totalorder %s11, 3
      %p117 = pnand %p115, %p116
      %p118 = pneg %p117
      // Predicated region
      $region25: #{tpu_custom_call.1} parent=5 // pred_check
        _
      $region26: #{tpu_custom_call.1} parent=5 // pred_check_branch
        %120 = sbr.rel (%p117) target = $region28
      $region27: #{tpu_custom_call.1} parent=5 // pred_region
        %s121 = ssub.s32 %s11, 1
        %s122 = smul.u32 2, %s16
        %p123 = scmp.lt.s32.totalorder %s122, 3
        %s124 = scalar_select %p123, %s122, 3
        %s125 = smul.addr %s124, 4
        %s126 = scalar_lea.vmem %s0, %s125
        %p127 = pneg %p37
        %p128 = pneg %p34
        %p129 = pneg %p58
        %p130 = pneg %p55
        %p131 = pneg %p84
        %p132 = pneg %p81
        %s133 = sand.u32 %s71, 1
        %s134 = scalar_lea.sflag [#allocation4], %s133
        %s135 = sand.u32 %s71, 1
        %s136 = smul.addr %s135, 8
        %s137 = scalar_lea.vmem [#allocation3], %s136
        %s138 = smul.u32 2, %s16
        %p139 = scmp.lt.s32.totalorder %s138, 3
        %s140 = scalar_select %p139, %s138, 3
        %s141 = smul.addr %s140, 4
        %s142 = scalar_lea.vmem %s0, %s141
        %s143 = smul.u32 2, %s16
        %v144 = vld [vmem:[%s1] sm:$0xff]
        %v145 = vld [vmem:[%s1 + $0x8] sm:$0x1]
        %v146 = vld [vmem:[%s142] sm:$0xff]
        %148 = vst [vmem:[#allocation1] ss:$2 sm:$0xff] %v146
        %v149 = vld.sshfl [vmem:[#allocation1] sm:$0xff pattern:$0x75316420]
        %v150 = vld.sshfl [vmem:[#allocation1 + $0x8] sm:$0xff pattern:$0x75316420]
        %vm151 = vcmask 31744
        %v153 = vsel %vm151, %v144, 0
        %v156 = vsel %vm151, %v145, 0
        %vm158 = vcmask 1043456
        %v159 = vsel %vm158, %v149, 0
        %v161 = vsel %vm158, %v150, 0
        %163 = vmatpush.msra.mxu0 0.0
        %164 = vmatpush.msra.mxu0 0.0
        %165 = vmatpush.msra.mxu0 0.0
        %166 = vmatpush.msra.mxu0 0.0
        %167 = vmatpush.msra.mxu0 0.0
        %168 = vmatpush.msra.mxu0 0.0
        %169 = vmatpush.msra.mxu0 0.0
        %170 = vmatpush.msra.mxu0 0.0
        %171 = vmatpush.msra.mxu0 0.0
        %172 = vmatpush.msra.mxu0 0.0
        %173 = vmatpush.msra.mxu0 0.0
        %174 = vmatpush.msra.mxu0 0.0
        %175 = vmatpush.msra.mxu0 0.0
        %176 = vmatpush.msra.mxu0 0.0
        %177 = vmatpush.msra.mxu0 0.0
        %178 = vmatpush.msra.mxu0 %v159
        %179 = vmatmul.f32.gmra.mxu0 %v153
        %v180 = vpop.f32.mrf.mxu0
        %v181 = vadd.f32 0.0, %v180
        %182 = vmatmul.f32.gmra.mxu0 %v156
        %v183 = vpop.f32.mrf.mxu0
        %v184 = vadd.f32 0.0, %v183
        %185 = vdwg.mxu0
        %186 = vmatpush.msra.mxu0 0.0
        %187 = vmatpush.msra.mxu0 0.0
        %188 = vmatpush.msra.mxu0 0.0
        %189 = vmatpush.msra.mxu0 0.0
        %190 = vmatpush.msra.mxu0 0.0
        %191 = vmatpush.msra.mxu0 0.0
        %192 = vmatpush.msra.mxu0 0.0
        %193 = vmatpush.msra.mxu0 0.0
        %194 = vmatpush.msra.mxu0 0.0
        %195 = vmatpush.msra.mxu0 0.0
        %196 = vmatpush.msra.mxu0 0.0
        %197 = vmatpush.msra.mxu0 0.0
        %198 = vmatpush.msra.mxu0 0.0
        %199 = vmatpush.msra.mxu0 0.0
        %200 = vmatpush.msra.mxu0 0.0
        %201 = vmatpush.msra.mxu0 %v161
        %202 = vmatmul.f32.gmra.mxu0 %v153
        %v203 = vpop.f32.mrf.mxu0
        %v204 = vadd.f32 0.0, %v203
        %205 = vmatmul.f32.gmra.mxu0 %v156
        %v206 = vpop.f32.mrf.mxu0
        %v207 = vadd.f32 0.0, %v206
        %208 = vdwg.mxu0
        %209 = vst [vmem:[#allocation2] sm:$0xff] %v181
        %210 = vst [vmem:[#allocation2 + $0x8] sm:$0xff] %v204
        %211 = vst [vmem:[#allocation2 + $0x10] sm:$0x1] %v184
        %212 = vst [vmem:[#allocation2 + $0x18] sm:$0x1] %v207
        %v213 = vld [vmem:[%s142] sm:$0xff]
        %v214 = vld [vmem:[#allocation2] sm:$0xff]
        %v215 = vld [vmem:[#allocation2 + $0x8] sm:$0xff]
        %v216 = vld [vmem:[#allocation2 + $0x10] sm:$0x1]
        %v217 = vld [vmem:[#allocation2 + $0x18] sm:$0x1]
        %vm218 = vcmask 1044484
        %v219 = vsel %vm218, %v214, -inf
        %v220 = vsel %vm218, %v215, -inf
        %v221 = vmax.f32 %v219, %v220
        %222 = vmax.xlane.f32.xlu0 %v221
        %v223 = vpop.xlane.xlu0 %222
        %v224 = vsub.f32 %v214, %v223
        %v225 = vsub.f32 %v215, %v223
        %v226 = vmul.f32 %v224, 1.442695
        %v227 = vpow.pop %v226
        %v228 = vmul.f32 %v225, 1.442695
        %v229 = vpow.pop %v228
        %v230 = vsel %vm218, %v227, 0.0
        %v231 = vsel %vm218, %v229, 0.0
        %v232 = vadd.f32 %v230, %v231
        %233 = vadd.xlane.f32.xlu0 %v232
        %v234 = vpop.xlane.xlu0 %233
        %v235 = vperm.slane %v227, 4
        %v236 = vperm.slane %v229, 4
        %v237 = vmul.f32 %v214, %v235
        %v238 = vmul.f32 %v215, %v236
        %v239 = vsel %vm158, %v237, 0.0
        %v240 = vsel %vm158, %v238, 0.0
        %v241 = vadd.f32 %v239, %v240
        %242 = vadd.xlane.f32.xlu0 %v241
        %v243 = vpop.xlane.xlu0 %242
        %v244 = vperm.slane %v234, 4
        %v245 = vrcp.pop %v244
        %v246 = vmul.f32 %v244, %v245
        %v247 = vsub.f32 1.0, %v246
        %v248 = vmul.f32 %v245, %v247
        %v249 = vadd.f32 %v245, %v248
        %vm250 = vweird.f32 %v244
        %vm251 = vweird.f32 %v245
        %vm252 = vmor %vm250, %vm251
        %v253 = vsel %vm252, %v245, %v249
        %v254 = vand.u32 2147483647, %v244
        %vm255 = vcmp.eq.f32.partialorder %v254, 8.507059e+37
        %v256 = vand.u32 %v244, 2147483648
        %v257 = vor.u32 1.1754944e-38, %v256
        %v258 = vsel %vm255, %v257, %v253
        %v259 = vmul.f32 %v243, %v258
        %v260 = vxor.u32 %v259, 2147483648
        %v261 = vmul.f32 %v260, 1.442695
        %v262 = vpow.pop %v261
        %v263 = vadd.f32 %v262, 1.0
        %v264 = vrcp.pop %v263
        %v265 = vmul.f32 %v263, %v264
        %v266 = vsub.f32 1.0, %v265
        %v267 = vmul.f32 %v264, %v266
        %v268 = vadd.f32 %v264, %v267
        %vm269 = vweird.f32 %v263
        %vm270 = vweird.f32 %v264
        %vm271 = vmor %vm269, %vm270
        %v272 = vsel %vm271, %v264, %v268
        %v273 = vand.u32 2147483647, %v263
        %vm274 = vcmp.eq.f32.partialorder %v273, 8.507059e+37
        %v275 = vand.u32 %v263, 2147483648
        %v276 = vor.u32 1.1754944e-38, %v275
        %v277 = vsel %vm274, %v276, %v272
        %v278 = vmul.f32 1.0, %v277
        %vm279 = vcmask 1046533
        %v280 = vsel %vm279, %v214, 0.0
        %v281 = vsel %vm279, %v215, 0.0
        %v282 = vadd.f32 %v280, %v281
        %283 = vadd.xlane.f32.xlu0 %v282
        %v284 = vpop.xlane.xlu0 %283
        %v285 = vmul.f32 %v284, 0.00390625
        %vm290 = vcmask 1045504
        %v291 = vrot.slane %v214, 2
        %v292 = vrot.slane %v216, 2
        %v293 = vsel %vm290, %v291, %v292
        %v294 = vrot.slane %v215, 2
        %v295 = vrot.slane %v217, 2
        %v296 = vsel %vm290, %v294, %v295
        %v299 = vmul.f32 %v285, %v293
        %v300 = vmul.f32 %v285, %v296
        %v303 = vrot.slane %v299, 5
        %v304 = vrot.slane %v300, 5
        %vm307 = vcmask 1041408
        %v308 = vsel %vm307, %v303, 0.0
        %v309 = vrot.slane %v308, 4
        %v310 = vadd.f32 %v308, %v309
        %v311 = vrot.slane %v310, 2
        %v312 = vadd.f32 %v310, %v311
        %v313 = vrot.slane %v312, 1
        %v314 = vadd.f32 %v312, %v313
        %v315 = vsel %vm307, %v304, 0.0
        %v316 = vrot.slane %v315, 4
        %v317 = vadd.f32 %v315, %v316
        %v318 = vrot.slane %v317, 2
        %v319 = vadd.f32 %v317, %v318
        %v320 = vrot.slane %v319, 1
        %v321 = vadd.f32 %v319, %v320
        %v322 = vmax.f32 %v314, %v321
        %323 = vmax.xlane.f32.xlu0 %v322
        %v324 = vpop.xlane.xlu0 %323
        %v325 = vsub.f32 %v314, %v324
        %v326 = vsub.f32 %v321, %v324
        %v327 = vmul.f32 %v325, 1.442695
        %v328 = vpow.pop %v327
        %v329 = vmul.f32 %v326, 1.442695
        %v330 = vpow.pop %v329
        %v331 = vadd.f32 %v328, %v330
        %332 = vadd.xlane.f32.xlu0 %v331
        %v333 = vpop.xlane.xlu0 %332
        %v334 = vrcp.pop %v333
        %v335 = vmul.f32 %v333, %v334
        %v336 = vsub.f32 1.0, %v335
        %v337 = vmul.f32 %v334, %v336
        %v338 = vadd.f32 %v334, %v337
        %vm339 = vweird.f32 %v333
        %vm340 = vweird.f32 %v334
        %vm341 = vmor %vm339, %vm340
        %v342 = vsel %vm341, %v334, %v338
        %v343 = vand.u32 2147483647, %v333
        %vm344 = vcmp.eq.f32.partialorder %v343, 8.507059e+37
        %v345 = vand.u32 %v333, 2147483648
        %v346 = vor.u32 1.1754944e-38, %v345
        %v347 = vsel %vm344, %v346, %v342
        %v348 = vmul.f32 %v328, %v347
        %v349 = vmul.f32 %v330, %v347
        %v350 = vxor.u32 %v348, 2147483648
        %v351 = vxor.u32 %v349, 2147483648
        %v352 = vmul.f32 %v350, 1.442695
        %v353 = vpow.pop %v352
        %v354 = vmul.f32 %v351, 1.442695
        %v355 = vpow.pop %v354
        %v356 = vadd.f32 %v353, 1.0
        %v357 = vadd.f32 %v355, 1.0
        %v358 = vrcp.pop %v356
        %v359 = vmul.f32 %v356, %v358
        %v360 = vsub.f32 1.0, %v359
        %v361 = vmul.f32 %v358, %v360
        %v362 = vadd.f32 %v358, %v361
        %vm363 = vweird.f32 %v356
        %vm364 = vweird.f32 %v358
        %vm365 = vmor %vm363, %vm364
        %v366 = vsel %vm365, %v358, %v362
        %v367 = vand.u32 2147483647, %v356
        %vm368 = vcmp.eq.f32.partialorder %v367, 8.507059e+37
        %v369 = vand.u32 %v356, 2147483648
        %v370 = vor.u32 1.1754944e-38, %v369
        %v371 = vsel %vm368, %v370, %v366
        %v372 = vmul.f32 1.0, %v371
        %v373 = vrcp.pop %v357
        %v374 = vmul.f32 %v357, %v373
        %v375 = vsub.f32 1.0, %v374
        %v376 = vmul.f32 %v373, %v375
        %v377 = vadd.f32 %v373, %v376
        %vm378 = vweird.f32 %v357
        %vm379 = vweird.f32 %v373
        %vm380 = vmor %vm378, %vm379
        %v381 = vsel %vm380, %v373, %v377
        %v382 = vand.u32 2147483647, %v357
        %vm383 = vcmp.eq.f32.partialorder %v382, 8.507059e+37
        %v384 = vand.u32 %v357, 2147483648
        %v385 = vor.u32 1.1754944e-38, %v384
        %v386 = vsel %vm383, %v385, %v381
        %v387 = vmul.f32 1.0, %v386
        %v390 = vunpack.c.l.s4 839922192
        %v391 = vunpack.c.0.s8 %v390
        %v392 = vperm.slane %v278, %v391
        %v394 = vmul.f32 %v213, %v392
        %v397 = vrot.slane %v387, 4
        %v398 = vsel %vm158, %v372, %v397
        %v400 = vmul.f32 %v394, %v398
        %401 = vst [vmem:[%s137] sm:$0xff] %v400
        %s402 = sand.u32 %s71, 1
        %s403 = scalar_lea.sflag [#allocation4], %s402
        %s404 = sand.u32 %s71, 1
        %s405 = smul.addr %s404, 8
        %s406 = scalar_lea.vmem [#allocation3], %s405
        // Predicated region
        $region29: #{tpu_custom_call.1} parent=27 // pred_check
          %p407 = pneg %p81
        $region30: #{tpu_custom_call.1} parent=27 // pred_check_branch
          %409 = sbr.rel (%p407) target = $region32
        $region31: #{tpu_custom_call.1} parent=27 // pred_region
          %411 = vsyncadd %s403, 0
          %s412 = smul.addr %s16, 2
          %s413 = smul.addr %s412, 4
          %s414 = scalar_lea.hbm %s2, %s413
          %s416 = sshll.u32 %s406, 4
          %s417 = int_to_ptr.vmem [resolvable:$true] %s416
          %s418 = sshll.u32 %s414, 4
          %s419 = int_to_ptr.hbm [resolvable:$true] %s418
          %421 = dma.vmem_to_hbm [thread:$0]  %s417, 128, %s419, %s403
        $region32: #{tpu_custom_call.1} parent=27 // pred_fallthru
          _
      $region28: #{tpu_custom_call.1} parent=5 // pred_fallthru
        _
      %p422 = scmp.le.s32.totalorder 2, %s11
      // Predicated region
      $region33: #{tpu_custom_call.1} parent=5 // pred_check
        %p423 = pneg %p422
      $region34: #{tpu_custom_call.1} parent=5 // pred_check_branch
        %425 = sbr.rel (%p423) target = $region36
      $region35: #{tpu_custom_call.1} parent=5 // pred_region
        %s426 = ssub.s32 %s11, 2
        // Predicated region
        $region37: #{tpu_custom_call.1} parent=35 // pred_check
          %p427 = pneg %p87
        $region38: #{tpu_custom_call.1} parent=35 // pred_check_branch
          %429 = sbr.rel (%p427) target = $region40
        $region39: #{tpu_custom_call.1} parent=35 // pred_region
          %s430 = sand.u32 %s72, 1
          %s431 = scalar_lea.sflag [#allocation4], %s430
          %s432 = sand.u32 %s72, 1
          %s433 = smul.addr %s432, 8
          %s434 = scalar_lea.vmem [#allocation3], %s433
          %436 = dma.done %s431, 128
        $region40: #{tpu_custom_call.1} parent=35 // pred_fallthru
          _
      $region36: #{tpu_custom_call.1} parent=5 // pred_fallthru
        _
    $region6: #{tpu_custom_call.1} parent=1 // loop_footer
      %s15 = sadd.s32 1, %s11
    $region7: #{tpu_custom_call.1} parent=1 // loop_footer_branch
      %10 = sbr.rel target = $region3
    $region8: #{tpu_custom_call.1} parent=1 // loop_exit
      _
    %437 = vsyncpa [#allocation4], 1
    %s438 = scalar_lea.sflag [#allocation4], 1
    %439 = vsyncpa %s438, 1

</llo_original>
